<compile_context>
chip_gen: v5e
topology: v5e:2x2
jax: 0.10.0
libtpu: 0.0.40
codegen_flags: <defaults>
</compile_context>

<pallas_src>
import math
import functools

import jax
import jax.numpy as jnp
from jax.experimental import pallas as pl
from jax.experimental.pallas import tpu as pltpu


def _round_up(v, m):
    return ((v + m - 1) // m) * m


def _cdiv(a, b):
    return (a + b - 1) // b


def _softplus(x):
    # Numerically-stable softplus (matches jax.nn.softplus): log1p avoids the
    # underflow-to-0 of log(1 + exp(-|x|)) for strongly negative inputs.
    return jnp.maximum(x, 0.0) + jnp.log1p(jnp.exp(-jnp.abs(x)))


def _bf16_transcendentals_ok():
    """True on chips with a bf16 EUP/VPU (v6e / v7x); False on v5e and older."""
    try:
        kind = jax.devices()[0].device_kind.lower()
    except Exception:
        return False
    return ("v6" in kind) or ("v7" in kind)


def _pick_batch_tile(M, max_tile):
    """Lane-aligned batch tile: as wide as allowed, but keep >= 2 grid tiles for
    large batches so the "parallel" axis can shard across v7x's 2 TensorCores."""
    max_tile = max(128, _round_up(max_tile, 128))
    m128 = _round_up(M, 128)
    if m128 <= 256:                       # tiny problems: a single small tile
        return m128
    return min(max_tile, _round_up(m128 // 2, 128))


def _pinn_fused_kernel(*refs, n_hidden, hidden_stacked, b_offsets, out_sizes,
                       activation, non_negative, tanh_bf16):
    """refs = (x, w0, [hidden weights...], w_last, b_all, out).

    x      : (bt, in_dim)          batch tile straight from HBM (row-major)
    w0     : (h0, in_dim)          PyTorch nn.Linear layout
    hidden : (n_hidden, h, h) stacked, or n_hidden separate (h_i, h_{i-1}) refs
    w_last : (out_dim, h_last)
    b_all  : (sum_padded, 1)       all biases packed, 8-row-aligned segments
    out    : (out_dim, bt)         batch on the lane axis -> lane-dense stores
    """
    x_ref = refs[0]
    w0_ref = refs[1]
    wl_ref = refs[-3]
    b_ref = refs[-2]
    o_ref = refs[-1]
    hidden_refs = refs[2:-3]

    def bias(layer):
        off = b_offsets[layer]
        size = out_sizes[layer]
        return b_ref[off:off + size, :]          # static slice -> (size, 1)

    def act(h):
        if activation == "tanh":
            if tanh_bf16:
                # bf16 EUP path (v6e/v7x): ~2x on the transcendental-bound part.
                return jnp.tanh(h.astype(jnp.bfloat16)).astype(jnp.float32)
            return jnp.tanh(h)
        if activation == "relu":
            return jnp.maximum(h, 0.0)
        if activation == "silu":
            return h * jax.nn.sigmoid(h)
        raise ValueError(f"unsupported activation: {activation}")

    # Layer 0: contract x's feature axis directly (no transpose anywhere,
    # host- or kernel-side).  Result is (h0, bt): batch on lanes.
    x = x_ref[...]
    h0 = jax.lax.dot_general(
        w0_ref[...], x, (((1,), (1,)), ((), ())),
        preferred_element_type=jnp.float32,
    ) + bias(0)
    a = act(h0)

    # Hidden layers: W(h,h) @ A(h,bt) + b(h,1)  — weights stay VMEM-resident.
    for j in range(n_hidden):
        w = hidden_refs[0][j] if hidden_stacked else hidden_refs[j][...]
        a = act(jnp.dot(w, a, preferred_element_type=jnp.float32) + bias(1 + j))

    # Output layer (+ optional softplus), written lane-dense as (out_dim, bt).
    out = jnp.dot(wl_ref[...], a, preferred_element_type=jnp.float32) + bias(n_hidden + 1)
    if non_negative:
        out = _softplus(out)
    o_ref[...] = out.astype(o_ref.dtype)


def pinn_forward(params, x, *, activation="tanh", non_negative=False,
                 max_batch_tile=4096, fast_tanh=False):
    """Fused PINN forward.  params = [(w (out,in), b (out,)), ...].

    Returns (M, out_dim) to match the PyTorch module.  The final transpose from
    the kernel's feature-major (out_dim, M) layout is free for out_dim == 1.
    """
    x = jnp.asarray(x, dtype=jnp.float32)
    M, in_dim = x.shape
    n_layers = len(params)
    assert n_layers >= 2, "need at least one hidden + one output layer"
    out_dim = int(params[-1][0].shape[0])
    assert in_dim == params[0][0].shape[1], "input dim mismatch with first layer"

    bt = _pick_batch_tile(M, max_batch_tile)
    grid = (_cdiv(M, bt),)

    # --- pack biases into one (sum_padded, 1) column, 8-row-aligned segments ---
    out_sizes = tuple(int(w.shape[0]) for w, _ in params)
    b_offsets = []
    segs = []
    off = 0
    for (w, b), size in zip(params, out_sizes):
        b_offsets.append(off)
        seg = jnp.asarray(b, jnp.float32).reshape(size, 1)
        pad = (-size) % 8
        if pad:
            seg = jnp.concatenate([seg, jnp.zeros((pad, 1), jnp.float32)], axis=0)
        segs.append(seg)
        off += size + pad
    b_all = jnp.concatenate(segs, axis=0)
    b_offsets = tuple(b_offsets)

    # --- operands / specs: x tiled over the batch, everything else resident ---
    w0 = jnp.asarray(params[0][0], jnp.float32)
    wl = jnp.asarray(params[-1][0], jnp.float32)
    hidden = params[1:-1]
    n_hidden = len(hidden)
    hidden_stacked = n_hidden > 0 and all(
        tuple(w.shape) == tuple(hidden[0][0].shape) for w, _ in hidden
    )

    operands = [x]
    in_specs = [pl.BlockSpec((bt, in_dim), lambda i: (i, 0))]

    operands.append(w0)
    in_specs.append(pl.BlockSpec(tuple(w0.shape), lambda i: (0, 0)))

    if n_hidden:
        if hidden_stacked:
            wh = jnp.stack([jnp.asarray(w, jnp.float32) for w, _ in hidden], axis=0)
            operands.append(wh)
            in_specs.append(pl.BlockSpec(tuple(wh.shape), lambda i: (0, 0, 0)))
        else:
            for w, _ in hidden:
                w = jnp.asarray(w, jnp.float32)
                operands.append(w)
                in_specs.append(pl.BlockSpec(tuple(w.shape), lambda i: (0, 0)))

    operands.append(wl)
    in_specs.append(pl.BlockSpec(tuple(wl.shape), lambda i: (0, 0)))
    operands.append(b_all)
    in_specs.append(pl.BlockSpec(tuple(b_all.shape), lambda i: (0, 0)))

    kernel = functools.partial(
        _pinn_fused_kernel,
        n_hidden=n_hidden,
        hidden_stacked=hidden_stacked,
        b_offsets=b_offsets,
        out_sizes=out_sizes,
        activation=activation,
        non_negative=non_negative,
        tanh_bf16=bool(fast_tanh) and activation == "tanh",
    )

    # Advisory cost estimate for XLA scheduling around the fused call.
    Mp = grid[0] * bt
    flops = 2 * Mp * sum(int(w.shape[0]) * int(w.shape[1]) for w, _ in params)
    transcendentals = Mp * sum(out_sizes[:-1])
    if non_negative:
        transcendentals += Mp * out_dim
    bytes_accessed = 4 * (in_dim * M + out_dim * M
                          + sum(int(w.size) + int(b.size) for w, b in params))

    # Default tiles fit comfortably in every generation's default scoped VMEM;
    # only raise the limit for unusually wide user-requested tiles (v5e's
    # default window is ~16 MiB and the (bt, in_dim) block is lane-padded).
    vmem_limit = None
    if bt > 4096:
        vmem_limit = int(min(64 * 1024 * 1024, (8 * 1024 + 2 * bt) * 1024))

    out_fm = pl.pallas_call(
        kernel,
        out_shape=jax.ShapeDtypeStruct((out_dim, M), jnp.float32),
        grid=grid,
        in_specs=in_specs,
        out_specs=pl.BlockSpec((out_dim, bt), lambda i: (0, i)),
        compiler_params=pltpu.CompilerParams(
            dimension_semantics=("parallel",),
            vmem_limit_bytes=vmem_limit,
        ),
        cost_estimate=pl.CostEstimate(
            flops=int(flops),
            transcendentals=int(transcendentals),
            bytes_accessed=int(bytes_accessed),
        ),
    )(*operands)

    # (out_dim, M) -> (M, out_dim); free for out_dim == 1.
    return out_fm.T


def init_pinn_params(layers, key, activation="tanh"):
    """Kaiming-normal init (fan_in, gain 5/3 for tanh), zero bias — matches the
    PyTorch module's tanh branch.  Weights kept in (out, in) layout."""
    params = []
    gain = 5.0 / 3.0 if activation == "tanh" else math.sqrt(2.0)
    for i in range(len(layers) - 1):
        key, sub = jax.random.split(key)
        fan_in, fan_out = layers[i], layers[i + 1]
        std = gain / math.sqrt(fan_in)
        w = std * jax.random.normal(sub, (fan_out, fan_in), dtype=jnp.float32)
        b = jnp.zeros((fan_out,), dtype=jnp.float32)
        params.append((w, b))
    return params


def _ref_forward(params, x, non_negative=False):
    """Pure-JAX reference (identical math to PINN.forward with tanh)."""
    a = jnp.tanh(x @ params[0][0].T + params[0][1])
    for w, b in params[1:-1]:
        a = jnp.tanh(a @ w.T + b)
    out = a @ params[-1][0].T + params[-1][1]
    if non_negative:
        out = jax.nn.softplus(out)
    return out


if __name__ == "__main__":
    # Small PINN: input dim 2 (e.g. (x, t)), 3 hidden layers of width 32, scalar output.
    layers = [2, 32, 32, 32, 1]
    key = jax.random.PRNGKey(0)
    pkey, xkey, xkey2 = jax.random.split(key, 3)
    params = init_pinn_params(layers, pkey, activation="tanh")

    # Small batch (ragged vs. the 128-lane tile -> exercises masked edge blocks).
    x = jax.random.normal(xkey, (8, layers[0]), dtype=jnp.float32)
    out = jax.block_until_ready(pinn_forward(params, x, non_negative=False))
    assert out.shape == (8, layers[-1])
    assert jnp.allclose(out, _ref_forward(params, x, False), atol=1e-4, rtol=1e-4)

    # Softplus (non_negative=True) path.
    out_nn = jax.block_until_ready(pinn_forward(params, x, non_negative=True))
    assert jnp.allclose(out_nn, _ref_forward(params, x, True), atol=1e-4, rtol=1e-4)
    assert bool(jnp.all(out_nn > 0.0))

    # Multi-tile path: 700 rows -> 2 parallel batch tiles + a ragged last tile.
    x_big = jax.random.normal(xkey2, (700, layers[0]), dtype=jnp.float32)
    ref_big = _ref_forward(params, x_big, False)
    out_big = jax.block_until_ready(pinn_forward(params, x_big, non_negative=False))
    assert out_big.shape == (700, layers[-1])
    assert jnp.allclose(out_big, ref_big, atol=1e-4, rtol=1e-4)

    # bf16-tanh fast path only where the EUP has bf16 (v6e / v7x), looser tolerance.
    if _bf16_transcendentals_ok():
        out_fast = jax.block_until_ready(
            pinn_forward(params, x_big, non_negative=False, fast_tanh=True))
        assert jnp.allclose(out_fast, ref_big, atol=5e-2, rtol=5e-2)

    print("KERNEL_OK")
</pallas_src>

<mosaic_0001>
module attributes {stable_mosaic.version = 11 : i64} {
  func.func @_pinn_fused_kernel(%arg0: i32, %arg1: memref<128x2xf32, #tpu.memory_space<vmem>>, %arg2: memref<32x2xf32, #tpu.memory_space<vmem>>, %arg3: memref<2x32x32xf32, #tpu.memory_space<vmem>>, %arg4: memref<1x32xf32, #tpu.memory_space<vmem>>, %arg5: memref<104x1xf32, #tpu.memory_space<vmem>>, %arg6: memref<1x128xf32, #tpu.memory_space<vmem>>) attributes {dimension_semantics = [#tpu.dimension_semantics<parallel>], iteration_bounds = array<i64: 1>, scalar_prefetch = 0 : i64, scratch_operands = 0 : i64, tpu.core_type = #tpu.core_type<tc>, window_params = [{transform_indices = @transform_0, window_bounds = array<i64: 128, 2>}, {pipeline_mode = #tpu.pipeline_mode<synchronous>, transform_indices = @transform_1, window_bounds = array<i64: 32, 2>}, {pipeline_mode = #tpu.pipeline_mode<synchronous>, transform_indices = @transform_2, window_bounds = array<i64: 2, 32, 32>}, {pipeline_mode = #tpu.pipeline_mode<synchronous>, transform_indices = @transform_3, window_bounds = array<i64: 1, 32>}, {pipeline_mode = #tpu.pipeline_mode<synchronous>, transform_indices = @transform_4, window_bounds = array<i64: 104, 1>}, {transform_indices = @transform_5, window_bounds = array<i64: 1, 128>}]} {
    %c0 = arith.constant 0 : index
    %c0_0 = arith.constant 0 : index
    %0 = vector.load %arg1[%c0, %c0_0] : memref<128x2xf32, #tpu.memory_space<vmem>>, vector<128x2xf32>
    %c0_1 = arith.constant 0 : index
    %c0_2 = arith.constant 0 : index
    %1 = vector.load %arg2[%c0_1, %c0_2] : memref<32x2xf32, #tpu.memory_space<vmem>>, vector<32x2xf32>
    %cst = arith.constant dense<0.000000e+00> : vector<32x128xf32>
    %2 = tpu.matmul %1, %0, %cst {dimension_numbers = #tpu.dot_dimension_numbers<[1], [1], [0], [0], [0, 0, 1, 0], [], []>} : vector<32x2xf32>, vector<128x2xf32>, vector<32x128xf32> -> vector<32x128xf32>
    %c0_3 = arith.constant 0 : index
    %c0_4 = arith.constant 0 : index
    %3 = vector.load %arg5[%c0_3, %c0_4] : memref<104x1xf32, #tpu.memory_space<vmem>>, vector<32x1xf32>
    %4 = vector.broadcast %3 : vector<32x1xf32> to vector<32x128xf32>
    %5 = arith.addf %2, %4 : vector<32x128xf32>
    %6 = math.tanh %5 : vector<32x128xf32>
    %c0_5 = arith.constant 0 : index
    %c0_6 = arith.constant 0 : index
    %c0_7 = arith.constant 0 : index
    %7 = vector.load %arg3[%c0_5, %c0_6, %c0_7] : memref<2x32x32xf32, #tpu.memory_space<vmem>>, vector<1x32x32xf32>
    %8 = vector.shape_cast %7 : vector<1x32x32xf32> to vector<32x32xf32>
    %cst_8 = arith.constant dense<0.000000e+00> : vector<32x128xf32>
    %9 = tpu.matmul %8, %6, %cst_8 {dimension_numbers = #tpu.dot_dimension_numbers<[1], [0], [0], [1], [0, 0, 1, 1], [], []>} : vector<32x32xf32>, vector<32x128xf32>, vector<32x128xf32> -> vector<32x128xf32>
    %c32 = arith.constant 32 : index
    %c0_9 = arith.constant 0 : index
    %10 = vector.load %arg5[%c32, %c0_9] : memref<104x1xf32, #tpu.memory_space<vmem>>, vector<32x1xf32>
    %11 = vector.broadcast %10 : vector<32x1xf32> to vector<32x128xf32>
    %12 = arith.addf %9, %11 : vector<32x128xf32>
    %13 = math.tanh %12 : vector<32x128xf32>
    %c1 = arith.constant 1 : index
    %c0_10 = arith.constant 0 : index
    %c0_11 = arith.constant 0 : index
    %14 = vector.load %arg3[%c1, %c0_10, %c0_11] : memref<2x32x32xf32, #tpu.memory_space<vmem>>, vector<1x32x32xf32>
    %15 = vector.shape_cast %14 : vector<1x32x32xf32> to vector<32x32xf32>
    %cst_12 = arith.constant dense<0.000000e+00> : vector<32x128xf32>
    %16 = tpu.matmul %15, %13, %cst_12 {dimension_numbers = #tpu.dot_dimension_numbers<[1], [0], [0], [1], [0, 0, 1, 1], [], []>} : vector<32x32xf32>, vector<32x128xf32>, vector<32x128xf32> -> vector<32x128xf32>
    %c64 = arith.constant 64 : index
    %c0_13 = arith.constant 0 : index
    %17 = vector.load %arg5[%c64, %c0_13] : memref<104x1xf32, #tpu.memory_space<vmem>>, vector<32x1xf32>
    %18 = vector.broadcast %17 : vector<32x1xf32> to vector<32x128xf32>
    %19 = arith.addf %16, %18 : vector<32x128xf32>
    %20 = math.tanh %19 : vector<32x128xf32>
    %c0_14 = arith.constant 0 : index
    %c0_15 = arith.constant 0 : index
    %21 = vector.load %arg4[%c0_14, %c0_15] : memref<1x32xf32, #tpu.memory_space<vmem>>, vector<1x32xf32>
    %cst_16 = arith.constant dense<0.000000e+00> : vector<1x128xf32>
    %22 = tpu.matmul %21, %20, %cst_16 {dimension_numbers = #tpu.dot_dimension_numbers<[1], [0], [0], [1], [0, 0, 1, 1], [], []>} : vector<1x32xf32>, vector<32x128xf32>, vector<1x128xf32> -> vector<1x128xf32>
    %c96 = arith.constant 96 : index
    %c0_17 = arith.constant 0 : index
    %23 = vector.load %arg5[%c96, %c0_17] : memref<104x1xf32, #tpu.memory_space<vmem>>, vector<1x1xf32>
    %24 = vector.broadcast %23 : vector<1x1xf32> to vector<1x128xf32>
    %25 = arith.addf %22, %24 : vector<1x128xf32>
    %c0_18 = arith.constant 0 : index
    %c0_19 = arith.constant 0 : index
    %26 = vector.load %arg6[%c0_18, %c0_19] : memref<1x128xf32, #tpu.memory_space<vmem>>, vector<1x128xf32>
    tpu.vector_store %arg6[%c0_18, %c0_19], %25 {strides = array<i32>} : memref<1x128xf32, #tpu.memory_space<vmem>>, vector<1x128xf32>,
    return
  }
  func.func @transform_0(%arg0: i32) -> (i32, i32) {
    %c0_i32 = arith.constant 0 : i32
    %c0_i32_0 = arith.constant 0 : i32
    return %arg0, %c0_i32 : i32, i32
  }
  func.func @transform_1(%arg0: i32) -> (i32, i32) {
    %c0_i32 = arith.constant 0 : i32
    %c0_i32_0 = arith.constant 0 : i32
    %c0_i32_1 = arith.constant 0 : i32
    return %c0_i32, %c0_i32_0 : i32, i32
  }
  func.func @transform_2(%arg0: i32) -> (i32, i32, i32) {
    %c0_i32 = arith.constant 0 : i32
    %c0_i32_0 = arith.constant 0 : i32
    %c0_i32_1 = arith.constant 0 : i32
    %c0_i32_2 = arith.constant 0 : i32
    return %c0_i32, %c0_i32_0, %c0_i32_1 : i32, i32, i32
  }
  func.func @transform_3(%arg0: i32) -> (i32, i32) {
    %c0_i32 = arith.constant 0 : i32
    %c0_i32_0 = arith.constant 0 : i32
    %c0_i32_1 = arith.constant 0 : i32
    return %c0_i32, %c0_i32_0 : i32, i32
  }
  func.func @transform_4(%arg0: i32) -> (i32, i32) {
    %c0_i32 = arith.constant 0 : i32
    %c0_i32_0 = arith.constant 0 : i32
    %c0_i32_1 = arith.constant 0 : i32
    return %c0_i32, %c0_i32_0 : i32, i32
  }
  func.func @transform_5(%arg0: i32) -> (i32, i32) {
    %c0_i32 = arith.constant 0 : i32
    %c0_i32_0 = arith.constant 0 : i32
    return %c0_i32, %arg0 : i32, i32
  }
}

</mosaic_0001>

<llo_original>
// kernel: tpu_custom_call.1
$region0: #{tpu_custom_call.1}
  #allocation0 [shape = 'u32[]', space=smem, size = 0x4, offset = 0x4, fixed_abs, tag = 'smem constant byte address 0x4 - core index']
  #allocation1 [shape = 'u32[72,128]{1,0:T(1,128)}', space=vmem, size = 0x9000, scoped, tag = 'internal scratch']
  %s0 = inlined_call_operand.vmem [shape: f32[8,2], index: 0, kind: input, shape index: {}]
  %s1 = inlined_call_operand.vmem [shape: f32[32,2], index: 1, kind: input, shape index: {}]
  %s2 = inlined_call_operand.vmem [shape: f32[2,32,32], index: 2, kind: input, shape index: {}]
  %s3 = inlined_call_operand.vmem [shape: f32[1,32], index: 3, kind: input, shape index: {}]
  %s4 = inlined_call_operand.vmem [shape: f32[104,1], index: 4, kind: input, shape index: {}]
  %s5 = inlined_call_operand.hbm [shape: f32[1,8], index: 5, kind: output, shape index: {}]
  %s6 = sld [smem:[#allocation0]]
  $region30: #{tpu_custom_call.1} parent=0
    _
  %s8 = ssub.s32 1, %s6
  %s9 = scalar_select 0, %s8, %s6
  $region1: #{tpu_custom_call.1} parent=0
    #allocation2 [shape = 'u8[512]{0}', space=vmem, size = 0x400, scoped, tag = 'output window, operand 0, single buffered']
    #allocation3 [shape = 's32[1]{0}', space=sflag, size = 0x4, scoped, tag = 'scoped memory for tpu_custom_call.1']
    %10 = vsyncpa [#allocation3], 0
    // Predicated region
    $region2: #{tpu_custom_call.1} parent=1 // pred_check
      _
    $region3: #{tpu_custom_call.1} parent=1 // pred_check_branch
      %12 = sbr.rel (0) target = $region5
    $region4: #{tpu_custom_call.1} parent=1 // pred_region
      _
    $region5: #{tpu_custom_call.1} parent=1 // pred_fallthru
      _
    // Predicated region
    $region6: #{tpu_custom_call.1} parent=1 // pred_check
      _
    $region7: #{tpu_custom_call.1} parent=1 // pred_check_branch
      %14 = sbr.rel (0) target = $region9
    $region8: #{tpu_custom_call.1} parent=1 // pred_region
      _
    $region9: #{tpu_custom_call.1} parent=1 // pred_fallthru
      _
    // Predicated region
    $region10: #{tpu_custom_call.1} parent=1 // pred_check
      _
    $region11: #{tpu_custom_call.1} parent=1 // pred_check_branch
      %16 = sbr.rel (0) target = $region13
    $region12: #{tpu_custom_call.1} parent=1 // pred_region
      _
    $region13: #{tpu_custom_call.1} parent=1 // pred_fallthru
      _
    // Predicated region
    $region14: #{tpu_custom_call.1} parent=1 // pred_check
      _
    $region15: #{tpu_custom_call.1} parent=1 // pred_check_branch
      %18 = sbr.rel (0) target = $region17
    $region16: #{tpu_custom_call.1} parent=1 // pred_region
      _
    $region17: #{tpu_custom_call.1} parent=1 // pred_fallthru
      _
    // Predicated region
    $region18: #{tpu_custom_call.1} parent=1 // pred_check
      _
    $region19: #{tpu_custom_call.1} parent=1 // pred_check_branch
      %20 = sbr.rel (0) target = $region21
    $region20: #{tpu_custom_call.1} parent=1 // pred_region
      _
    $region21: #{tpu_custom_call.1} parent=1 // pred_fallthru
      _
    %v21 = vld [vmem:[%s0] sm:$0xff]
    %v22 = vld [vmem:[%s0 + $0x8] sm:$0xff]
    %v23 = vld [vmem:[%s0 + $0x10] sm:$0xff]
    %v24 = vld [vmem:[%s0 + $0x18] sm:$0xff]
    %v25 = vld [vmem:[%s0 + $0x20] sm:$0xff]
    %v26 = vld [vmem:[%s0 + $0x28] sm:$0xff]
    %v27 = vld [vmem:[%s0 + $0x30] sm:$0xff]
    %v28 = vld [vmem:[%s0 + $0x38] sm:$0xff]
    %v29 = vld [vmem:[%s0 + $0x40] sm:$0xff]
    %v30 = vld [vmem:[%s0 + $0x48] sm:$0xff]
    %v31 = vld [vmem:[%s0 + $0x50] sm:$0xff]
    %v32 = vld [vmem:[%s0 + $0x58] sm:$0xff]
    %v33 = vld [vmem:[%s0 + $0x60] sm:$0xff]
    %v34 = vld [vmem:[%s0 + $0x68] sm:$0xff]
    %v35 = vld [vmem:[%s0 + $0x70] sm:$0xff]
    %v36 = vld [vmem:[%s0 + $0x78] sm:$0xff]
    %v37 = vld [vmem:[%s1] sm:$0xff]
    %v38 = vld [vmem:[%s1 + $0x8] sm:$0xff]
    %v39 = vld [vmem:[%s1 + $0x10] sm:$0xff]
    %v40 = vld [vmem:[%s1 + $0x18] sm:$0xff]
    %v41 = vld [vmem:[%s4] sm:$0xff]
    %v42 = vld [vmem:[%s4 + $0x8] sm:$0xff]
    %v43 = vld [vmem:[%s4 + $0x10] sm:$0xff]
    %v44 = vld [vmem:[%s4 + $0x18] sm:$0xff]
    %46 = vset.pattern.permute.xlu0 0
    %47 = vperm.xlu0 %46, %v41
    %v48 = vpop.permute.xlu0 %47
    %51 = vset.pattern.permute.xlu0 0
    %52 = vperm.xlu0 %51, %v42
    %v53 = vpop.permute.xlu0 %52
    %56 = vset.pattern.permute.xlu0 0
    %57 = vperm.xlu0 %56, %v43
    %v58 = vpop.permute.xlu0 %57
    %61 = vset.pattern.permute.xlu0 0
    %62 = vperm.xlu0 %61, %v44
    %v63 = vpop.permute.xlu0 %62
    %vm65 = vcmask 15360
    %v67 = vsel %vm65, %v37, 0
    %v70 = vsel %vm65, %v38, 0
    %v73 = vsel %vm65, %v39, 0
    %v76 = vsel %vm65, %v40, 0
    %v79 = vsel %vm65, %v21, 0
    %v82 = vsel %vm65, %v22, 0
    %v85 = vsel %vm65, %v23, 0
    %v88 = vsel %vm65, %v24, 0
    %v91 = vsel %vm65, %v25, 0
    %v94 = vsel %vm65, %v26, 0
    %v97 = vsel %vm65, %v27, 0
    %v100 = vsel %vm65, %v28, 0
    %v103 = vsel %vm65, %v29, 0
    %v106 = vsel %vm65, %v30, 0
    %v109 = vsel %vm65, %v31, 0
    %v112 = vsel %vm65, %v32, 0
    %v115 = vsel %vm65, %v33, 0
    %v118 = vsel %vm65, %v34, 0
    %v121 = vsel %vm65, %v35, 0
    %v124 = vsel %vm65, %v36, 0
    %126 = vmatpush.xpose.msra.mxu0 %v124
    %127 = vmatpush.xpose.msra.mxu0 %v121
    %128 = vmatpush.xpose.msra.mxu0 %v118
    %129 = vmatpush.xpose.msra.mxu0 %v115
    %130 = vmatpush.xpose.msra.mxu0 %v112
    %131 = vmatpush.xpose.msra.mxu0 %v109
    %132 = vmatpush.xpose.msra.mxu0 %v106
    %133 = vmatpush.xpose.msra.mxu0 %v103
    %134 = vmatpush.xpose.msra.mxu0 %v100
    %135 = vmatpush.xpose.msra.mxu0 %v97
    %136 = vmatpush.xpose.msra.mxu0 %v94
    %137 = vmatpush.xpose.msra.mxu0 %v91
    %138 = vmatpush.xpose.msra.mxu0 %v88
    %139 = vmatpush.xpose.msra.mxu0 %v85
    %140 = vmatpush.xpose.msra.mxu0 %v82
    %141 = vmatpush.xpose.msra.mxu0 %v79
    %142 = vmatmul.f32.gmra.mxu0 %v67
    %v143 = vpop.f32.mrf.mxu0
    %v144 = vadd.f32 %v48, %v143
    %145 = vmatmul.f32.gmra.mxu0 %v70
    %v146 = vpop.f32.mrf.mxu0
    %v147 = vadd.f32 %v53, %v146
    %148 = vmatmul.f32.gmra.mxu0 %v73
    %v149 = vpop.f32.mrf.mxu0
    %v150 = vadd.f32 %v58, %v149
    %151 = vmatmul.f32.gmra.mxu0 %v76
    %v152 = vpop.f32.mrf.mxu0
    %v153 = vadd.f32 %v63, %v152
    %154 = vdwg.mxu0
    %v155 = vtanh.pop %v144
    %v156 = vtanh.pop %v147
    %v157 = vtanh.pop %v150
    %v158 = vtanh.pop %v153
    %v159 = vld [vmem:[%s2] sm:$0xff]
    %v160 = vld [vmem:[%s2 + $0x8] sm:$0xff]
    %v161 = vld [vmem:[%s2 + $0x10] sm:$0xff]
    %v162 = vld [vmem:[%s2 + $0x18] sm:$0xff]
    %v163 = vld [vmem:[%s4 + $0x20] sm:$0xff]
    %v164 = vld [vmem:[%s4 + $0x28] sm:$0xff]
    %v165 = vld [vmem:[%s4 + $0x30] sm:$0xff]
    %v166 = vld [vmem:[%s4 + $0x38] sm:$0xff]
    %168 = vset.pattern.permute.xlu0 0
    %169 = vperm.xlu0 %168, %v163
    %v170 = vpop.permute.xlu0 %169
    %173 = vset.pattern.permute.xlu0 0
    %174 = vperm.xlu0 %173, %v164
    %v175 = vpop.permute.xlu0 %174
    %178 = vset.pattern.permute.xlu0 0
    %179 = vperm.xlu0 %178, %v165
    %v180 = vpop.permute.xlu0 %179
    %183 = vset.pattern.permute.xlu0 0
    %184 = vperm.xlu0 %183, %v166
    %v185 = vpop.permute.xlu0 %184
    %vm187 = vcmask 261120
    %v189 = vsel %vm187, %v159, 0
    %v192 = vsel %vm187, %v160, 0
    %v195 = vsel %vm187, %v161, 0
    %v198 = vsel %vm187, %v162, 0
    %200 = vmatpush.msra.mxu0 0.0
    %201 = vmatpush.msra.mxu0 0.0
    %202 = vmatpush.msra.mxu0 0.0
    %203 = vmatpush.msra.mxu0 0.0
    %204 = vmatpush.msra.mxu0 0.0
    %205 = vmatpush.msra.mxu0 0.0
    %206 = vmatpush.msra.mxu0 0.0
    %207 = vmatpush.msra.mxu0 0.0
    %208 = vmatpush.msra.mxu0 0.0
    %209 = vmatpush.msra.mxu0 0.0
    %210 = vmatpush.msra.mxu0 0.0
    %211 = vmatpush.msra.mxu0 0.0
    %212 = vmatpush.msra.mxu0 %v158
    %213 = vmatpush.msra.mxu0 %v157
    %214 = vmatpush.msra.mxu0 %v156
    %215 = vmatpush.msra.mxu0 %v155
    %216 = vmatmul.f32.gmra.mxu0 %v189
    %v217 = vpop.f32.mrf.mxu0
    %v218 = vadd.f32 %v170, %v217
    %219 = vmatmul.f32.gmra.mxu0 %v192
    %v220 = vpop.f32.mrf.mxu0
    %v221 = vadd.f32 %v175, %v220
    %222 = vmatmul.f32.gmra.mxu0 %v195
    %v223 = vpop.f32.mrf.mxu0
    %v224 = vadd.f32 %v180, %v223
    %225 = vmatmul.f32.gmra.mxu0 %v198
    %v226 = vpop.f32.mrf.mxu0
    %v227 = vadd.f32 %v185, %v226
    %228 = vdwg.mxu0
    %v229 = vtanh.pop %v218
    %v230 = vtanh.pop %v221
    %v231 = vtanh.pop %v224
    %v232 = vtanh.pop %v227
    %s233 = scalar_lea.vmem %s2, 32
    %v234 = vld [vmem:[%s233] sm:$0xff]
    %v235 = vld [vmem:[%s233 + $0x8] sm:$0xff]
    %v236 = vld [vmem:[%s233 + $0x10] sm:$0xff]
    %v237 = vld [vmem:[%s233 + $0x18] sm:$0xff]
    %v238 = vld [vmem:[%s4 + $0x40] sm:$0xff]
    %v239 = vld [vmem:[%s4 + $0x48] sm:$0xff]
    %v240 = vld [vmem:[%s4 + $0x50] sm:$0xff]
    %v241 = vld [vmem:[%s4 + $0x58] sm:$0xff]
    %243 = vset.pattern.permute.xlu0 0
    %244 = vperm.xlu0 %243, %v238
    %v245 = vpop.permute.xlu0 %244
    %248 = vset.pattern.permute.xlu0 0
    %249 = vperm.xlu0 %248, %v239
    %v250 = vpop.permute.xlu0 %249
    %253 = vset.pattern.permute.xlu0 0
    %254 = vperm.xlu0 %253, %v240
    %v255 = vpop.permute.xlu0 %254
    %258 = vset.pattern.permute.xlu0 0
    %259 = vperm.xlu0 %258, %v241
    %v260 = vpop.permute.xlu0 %259
    %v263 = vsel %vm187, %v234, 0
    %v266 = vsel %vm187, %v235, 0
    %v269 = vsel %vm187, %v236, 0
    %v272 = vsel %vm187, %v237, 0
    %274 = vmatpush.msra.mxu0 0.0
    %275 = vmatpush.msra.mxu0 0.0
    %276 = vmatpush.msra.mxu0 0.0
    %277 = vmatpush.msra.mxu0 0.0
    %278 = vmatpush.msra.mxu0 0.0
    %279 = vmatpush.msra.mxu0 0.0
    %280 = vmatpush.msra.mxu0 0.0
    %281 = vmatpush.msra.mxu0 0.0
    %282 = vmatpush.msra.mxu0 0.0
    %283 = vmatpush.msra.mxu0 0.0
    %284 = vmatpush.msra.mxu0 0.0
    %285 = vmatpush.msra.mxu0 0.0
    %286 = vmatpush.msra.mxu0 %v232
    %287 = vmatpush.msra.mxu0 %v231
    %288 = vmatpush.msra.mxu0 %v230
    %289 = vmatpush.msra.mxu0 %v229
    %290 = vmatmul.f32.gmra.mxu0 %v263
    %v291 = vpop.f32.mrf.mxu0
    %v292 = vadd.f32 %v245, %v291
    %293 = vmatmul.f32.gmra.mxu0 %v266
    %v294 = vpop.f32.mrf.mxu0
    %v295 = vadd.f32 %v250, %v294
    %296 = vmatmul.f32.gmra.mxu0 %v269
    %v297 = vpop.f32.mrf.mxu0
    %v298 = vadd.f32 %v255, %v297
    %299 = vmatmul.f32.gmra.mxu0 %v272
    %v300 = vpop.f32.mrf.mxu0
    %v301 = vadd.f32 %v260, %v300
    %302 = vdwg.mxu0
    %v303 = vtanh.pop %v292
    %v304 = vtanh.pop %v295
    %v305 = vtanh.pop %v298
    %v306 = vtanh.pop %v301
    %v307 = vld [vmem:[%s3] sm:$0x1]
    %v308 = vld [vmem:[%s4 + $0x60] sm:$0x1]
    %310 = vset.pattern.permute.xlu0 0
    %311 = vperm.xlu0 %310, %v308
    %v312 = vpop.permute.xlu0 %311
    %v315 = vsel %vm187, %v307, 0
    %317 = vmatpush.msra.mxu0 0.0
    %318 = vmatpush.msra.mxu0 0.0
    %319 = vmatpush.msra.mxu0 0.0
    %320 = vmatpush.msra.mxu0 0.0
    %321 = vmatpush.msra.mxu0 0.0
    %322 = vmatpush.msra.mxu0 0.0
    %323 = vmatpush.msra.mxu0 0.0
    %324 = vmatpush.msra.mxu0 0.0
    %325 = vmatpush.msra.mxu0 0.0
    %326 = vmatpush.msra.mxu0 0.0
    %327 = vmatpush.msra.mxu0 0.0
    %328 = vmatpush.msra.mxu0 0.0
    %329 = vmatpush.msra.mxu0 %v306
    %330 = vmatpush.msra.mxu0 %v305
    %331 = vmatpush.msra.mxu0 %v304
    %332 = vmatpush.msra.mxu0 %v303
    %333 = vmatmul.f32.gmra.mxu0 %v315
    %v334 = vpop.f32.mrf.mxu0
    %v335 = vadd.f32 %v312, %v334
    %336 = vdwg.mxu0
    %337 = vst [vmem:[#allocation2] sm:$0x1] %v335
    // Predicated region
    $region22: #{tpu_custom_call.1} parent=1 // pred_check
      _
    $region23: #{tpu_custom_call.1} parent=1 // pred_check_branch
      %339 = sbr.rel (0) target = $region25
    $region24: #{tpu_custom_call.1} parent=1 // pred_region
      %341 = vsyncadd [#allocation3], 0
      %s343 = sshll.u32 [#allocation2], 4
      %s344 = int_to_ptr.vmem [resolvable:$true] %s343
      %s345 = sshll.u32 %s5, 4
      %s346 = int_to_ptr.hbm [resolvable:$true] %s345
      %348 = dma.vmem_to_hbm [thread:$0]  %s344, 16, %s346, [#allocation3]
    $region25: #{tpu_custom_call.1} parent=1 // pred_fallthru
      _
    // Predicated region
    $region26: #{tpu_custom_call.1} parent=1 // pred_check
      _
    $region27: #{tpu_custom_call.1} parent=1 // pred_check_branch
      %350 = sbr.rel (0) target = $region29
    $region28: #{tpu_custom_call.1} parent=1 // pred_region
      %352 = dma.done [#allocation3], 16
    $region29: #{tpu_custom_call.1} parent=1 // pred_fallthru
      _
    %353 = vsyncpa [#allocation3], 1

</llo_original>
